<compile_context>
chip_gen: v7x
topology: tpu7x:2x2x1
jax: 0.10.0
libtpu: 0.0.40
codegen_flags: <defaults>
</compile_context>

<pallas_src>
import functools

import jax
import jax.numpy as jnp
from jax import lax
from jax.experimental import pallas as pl
from jax.experimental.pallas import tpu as pltpu


def _round_up(x, m):
    return (x + m - 1) // m * m


def conv_block_kernel(x_ref, w_ref, c_ref, mask_ref, out_ref, patch_ref, *,
                      wp, dil, eps, neg_slope, groups, inv_count):
    """One grid step: `nb` images of the batch.

    x_ref     : (nb, C, Lin)   bf16  zero-padded, row-major-flattened image
    w_ref     : (O, 9*C)       bf16  conv taps, col k*C+cin <-> tap (kh,kw)=(k//3,k%3)
    c_ref     : (O, 128)       f32   col0: bias - group_mean(bias), col1: gamma, col2: beta
    mask_ref  : (1, Lq)        f32   1.0 on valid output lanes, 0.0 elsewhere
    out_ref   : (nb, O, Lq)    f32/bf16
    patch_ref : (9*C, Lq)      bf16  VMEM scratch holding the 9 shifted tap slices
    """
    nb, o, lq = out_ref.shape
    c = x_ref.shape[1]
    cg = o // groups

    bcen = c_ref[:, 0:1]                 # (O, 1) bias minus its group mean
    gamma = c_ref[:, 1:2]                # (O, 1)
    beta = c_ref[:, 2:3]                 # (O, 1)
    mask = mask_ref[...]                 # (1, Lq)

    def gmix(col):
        """Per-channel column (O,1) -> per-group sums broadcast back to (O,1)."""
        if cg == 1:
            return col
        g = jnp.sum(col.reshape(groups, cg), axis=1, keepdims=True)   # (groups, 1)
        return jnp.broadcast_to(g, (groups, cg)).reshape(o, 1)

    def body(b, carry):
        # --- build the (9*C, Lq) shifted-tap slab ---------------------------
        # output lane q = h*Wp + w reads input lane q + dil*(kh*Wp + kw)
        xi = x_ref[b]                                        # (C, Lin)
        for k in range(9):
            d = dil * ((k // 3) * wp + (k % 3))              # static lane shift
            patch_ref[k * c:(k + 1) * c, :] = xi[:, d:d + lq]

        # --- one K = 9*C matmul on the MXU, f32 accumulation ----------------
        acc = jnp.dot(w_ref[...], patch_ref[...],
                      preferred_element_type=jnp.float32)    # (O, Lq)

        # --- GroupNorm stats: lane reduce -> VPU group mix (two-pass var) ---
        s = jnp.sum(acc * mask, axis=-1, keepdims=True)      # (O, 1)
        mean_conv = gmix(s) * inv_count                      # group mean of conv
        # (conv + bias) - group_mean(conv + bias) == acc + shift1
        shift1 = bcen - mean_conv                            # (O, 1)
        yc = (acc + shift1) * mask                           # centered, masked
        var = gmix(jnp.sum(yc * yc, axis=-1, keepdims=True)) * inv_count

        # --- fused affine + activation ---------------------------------------
        scale = lax.rsqrt(var + eps) * gamma                 # (O, 1)
        shift = shift1 * scale + beta                        # (O, 1)
        z = acc * scale + shift
        if neg_slope == 0.0:
            z = jnp.maximum(z, 0.0)                          # ReLU
        else:
            z = jnp.maximum(z, neg_slope * z)                # LeakyReLU
        out_ref[b] = z.astype(out_ref.dtype)
        return carry

    if nb == 1:
        body(0, 0)
    else:
        lax.fori_loop(0, nb, body, 0)


def conv_block_2d(x, weight, bias, gamma, beta, *, groups=8, dilation=None,
                  act="ReLU", eps=1e-5, batch_block=None,
                  compute_dtype=jnp.bfloat16, return_padded=False):
    """x: (N, C, H, W) f32; weight: (O, C, 3, 3); bias/gamma/beta: (O,)."""
    N, C, H, W = x.shape
    O = weight.shape[0]
    assert O % groups == 0, "dim_out must be divisible by groups"
    cg = O // groups
    dil = 1 if dilation is None else int(dilation)
    neg_slope = {"ReLU": 0.0, "LeakyReLU": 0.01}[act]

    Hp, Wp = H + 2 * dil, W + 2 * dil
    Lq = _round_up(H * Wp, 128)                       # lane-dense working width
    Lin = _round_up(Lq + dil * (2 * Wp + 2), 128)     # covers the largest tap shift

    # bf16 output only when the bf16 (16,128) tiling does not pad sublanes.
    out_dtype = jnp.bfloat16 if (O % 16 == 0) else jnp.float32
    out_isz = jnp.dtype(out_dtype).itemsize
    in_isz = jnp.dtype(compute_dtype).itemsize

    # --- the ONLY wrapper-side data prep: pad + flatten (no 9x im2col) -------
    xp = jnp.pad(x, ((0, 0), (0, 0), (dil, dil), (dil, dil)))        # (N,C,Hp,Wp)
    xf = jnp.pad(xp.reshape(N, C, Hp * Wp),
                 ((0, 0), (0, 0), (0, Lin - Hp * Wp))).astype(compute_dtype)

    # conv taps as one (O, 9*C) slab matching the kernel's patch row order
    wt = jnp.transpose(weight, (0, 2, 3, 1)).reshape(O, 9 * C).astype(compute_dtype)

    # packed per-channel constants (lane-dense (O,128) slab)
    gid = jnp.arange(O) // cg
    same = (gid[:, None] == gid[None, :]).astype(jnp.float32)
    bias32 = bias.astype(jnp.float32)
    bcen = bias32 - (same / float(cg)) @ bias32       # bias minus its group mean
    cwidth = 128
    consts = jnp.zeros((O, cwidth), jnp.float32)
    consts = consts.at[:, 0].set(bcen)
    consts = consts.at[:, 1].set(gamma.astype(jnp.float32))
    consts = consts.at[:, 2].set(beta.astype(jnp.float32))

    # valid-lane mask: output lane q = h*Wp + w is valid iff h < H and w < W
    q = jnp.arange(Lq)
    mask = (((q % Wp) < W) & (q < H * Wp)).astype(jnp.float32)[None, :]

    # --- generation-aware batch_block / VMEM budget ---------------------------
    try:
        vmem_cap = int(pltpu.get_tpu_info().vmem_capacity_bytes)
    except Exception:
        vmem_cap = 64 * 1024 * 1024                   # conservative: assume v7x
    budget = int(vmem_cap * 0.6)
    fixed = (O * 9 * C * in_isz + O * cwidth * 4 + Lq * 4
             + 9 * C * Lq * in_isz)                   # weights/consts/mask/scratch
    # keep >= 2 grid steps on small-VMEM (2-TensorCore) chips so both TCs get work
    min_grid = 2 if (vmem_cap <= 64 * 1024 * 1024 and N >= 2) else 1
    if batch_block is None:
        batch_block = 1
        for bb in range(1, N + 1):
            if N % bb:
                continue
            if (N // bb) < min_grid:
                continue
            need_bb = 2 * bb * (C * Lin * in_isz + O * Lq * out_isz) + fixed
            if need_bb <= budget:
                batch_block = bb
    assert N % batch_block == 0, "batch must be divisible by batch_block"
    need = 2 * batch_block * (C * Lin * in_isz + O * Lq * out_isz) + fixed
    vmem_limit = int(min(max(32 * 1024 * 1024, 2 * need),
                         max(budget, need + (4 << 20))))

    kernel = functools.partial(conv_block_kernel, wp=Wp, dil=dil, eps=float(eps),
                               neg_slope=neg_slope, groups=groups,
                               inv_count=1.0 / float(cg * H * W))

    cost = pl.CostEstimate(
        flops=2 * 9 * C * O * H * W * N + 10 * N * O * Lq,
        transcendentals=N * O,
        bytes_accessed=(int(xf.size) * in_isz + int(wt.size) * in_isz
                        + int(consts.size) * 4 + int(mask.size) * 4
                        + N * O * Lq * out_isz))

    out = pl.pallas_call(
        kernel,
        out_shape=jax.ShapeDtypeStruct((N, O, Lq), out_dtype),
        grid=(N // batch_block,),
        in_specs=[
            pl.BlockSpec((batch_block, C, Lin), lambda n: (n, 0, 0)),
            pl.BlockSpec((O, 9 * C), lambda n: (0, 0)),
            pl.BlockSpec((O, cwidth), lambda n: (0, 0)),
            pl.BlockSpec((1, Lq), lambda n: (0, 0)),
        ],
        out_specs=pl.BlockSpec((batch_block, O, Lq), lambda n: (n, 0, 0)),
        scratch_shapes=[pltpu.VMEM((9 * C, Lq), compute_dtype)],
        compiler_params=pltpu.CompilerParams(
            dimension_semantics=("parallel",),
            vmem_limit_bytes=vmem_limit),
        cost_estimate=cost,
    )(xf, wt, consts, mask)

    if return_padded:
        # lane-dense (N, O, Lq) slab, row stride Wp -- hand to fused consumers
        return out, Wp
    # TODO(synk): fold this crop into the downstream op (it is one extra
    # output-sized XLA pass); use return_padded=True to skip it.
    out = out[:, :, :H * Wp].reshape(N, O, H, Wp)[:, :, :, :W]
    return out.astype(jnp.float32)


def reference(x, weight, bias, gamma, beta, *, groups, dilation=1, eps=1e-5,
              neg_slope=0.0):
    """Plain-JAX reference matching torch Conv2d(pad=dil, dil) + GroupNorm + act."""
    d = dilation
    y = lax.conv_general_dilated(
        x, weight, window_strides=(1, 1), padding=[(d, d), (d, d)],
        rhs_dilation=(d, d), dimension_numbers=("NCHW", "OIHW", "NCHW"))
    y = y + bias[None, :, None, None]
    N, O, H, W = y.shape
    yg = y.reshape(N, groups, -1)
    m = yg.mean(-1, keepdims=True)
    v = yg.var(-1, keepdims=True)
    yn = ((yg - m) / jnp.sqrt(v + eps)).reshape(N, O, H, W)
    yn = yn * gamma[None, :, None, None] + beta[None, :, None, None]
    if neg_slope == 0.0:
        return jnp.maximum(yn, 0.0)
    return jnp.maximum(yn, neg_slope * yn)


if __name__ == "__main__":
    # ConvBlock2D(dim=4, dim_out=8, groups=8, dilation=None, act='ReLU')
    N, C, O, H, W = 2, 4, 8, 16, 16
    groups = 8

    key = jax.random.PRNGKey(0)
    kx, kw, kb, kg, kbt = jax.random.split(key, 5)
    x = jax.random.normal(kx, (N, C, H, W), dtype=jnp.float32)
    weight = jax.random.normal(kw, (O, C, 3, 3), dtype=jnp.float32) * 0.1
    bias = jax.random.normal(kb, (O,), dtype=jnp.float32) * 0.1
    gamma = 1.0 + 0.1 * jax.random.normal(kg, (O,), dtype=jnp.float32)
    beta = 0.1 * jax.random.normal(kbt, (O,), dtype=jnp.float32)

    out = conv_block_2d(x, weight, bias, gamma, beta, groups=groups)
    out = jax.block_until_ready(out)
    assert out.shape == (N, O, H, W)

    # Tight check against a reference fed the same bf16-rounded conv operands
    # (the kernel multiplies bf16 operands and accumulates in f32 on the MXU).
    xq = x.astype(jnp.bfloat16).astype(jnp.float32)
    wq = weight.astype(jnp.bfloat16).astype(jnp.float32)
    ref_q = jax.block_until_ready(
        reference(xq, wq, bias, gamma, beta, groups=groups))
    assert jnp.allclose(out, ref_q, atol=2e-3, rtol=2e-3), (
        float(jnp.max(jnp.abs(out - ref_q))))

    # Loose sanity check against the full-f32 module semantics.
    ref_f = jax.block_until_ready(
        reference(x, weight, bias, gamma, beta, groups=groups))
    assert jnp.allclose(out, ref_f, atol=5e-2, rtol=5e-2), (
        float(jnp.max(jnp.abs(out - ref_f))))

    # Dilated + LeakyReLU variant (ConvBlock2D(..., dilation=2, act='LeakyReLU')).
    out2 = jax.block_until_ready(
        conv_block_2d(x, weight, bias, gamma, beta, groups=groups,
                      dilation=2, act="LeakyReLU"))
    ref2 = jax.block_until_ready(
        reference(xq, wq, bias, gamma, beta, groups=groups, dilation=2,
                  neg_slope=0.01))
    assert out2.shape == (N, O, H, W)
    assert jnp.allclose(out2, ref2, atol=2e-3, rtol=2e-3), (
        float(jnp.max(jnp.abs(out2 - ref2))))

    print("KERNEL_OK")
</pallas_src>

<mosaic_0001>
module attributes {stable_mosaic.version = 11 : i64} {
  func.func @conv_block_kernel(%arg0: i32, %arg1: memref<1x4x512xbf16, #tpu.memory_space<vmem>>, %arg2: memref<8x36xbf16, #tpu.memory_space<vmem>>, %arg3: memref<8x128xf32, #tpu.memory_space<vmem>>, %arg4: memref<1x384xf32, #tpu.memory_space<vmem>>, %arg5: memref<1x8x384xf32, #tpu.memory_space<vmem>>, %arg6: memref<36x384xbf16, #tpu.memory_space<vmem>>) attributes {dimension_semantics = [#tpu.dimension_semantics<parallel>], iteration_bounds = array<i64: 2>, scalar_prefetch = 0 : i64, scratch_operands = 1 : i64, tpu.core_type = #tpu.core_type<tc>, window_params = [{transform_indices = @transform_0, window_bounds = array<i64: 1, 4, 512>}, {pipeline_mode = #tpu.pipeline_mode<synchronous>, transform_indices = @transform_1, window_bounds = array<i64: 8, 36>}, {pipeline_mode = #tpu.pipeline_mode<synchronous>, transform_indices = @transform_2, window_bounds = array<i64: 8, 128>}, {pipeline_mode = #tpu.pipeline_mode<synchronous>, transform_indices = @transform_3, window_bounds = array<i64: 1, 384>}, {transform_indices = @transform_4, window_bounds = array<i64: 1, 8, 384>}]} {
    %c0 = arith.constant 0 : index
    %c0_0 = arith.constant 0 : index
    %0 = vector.load %arg3[%c0, %c0_0] : memref<8x128xf32, #tpu.memory_space<vmem>>, vector<8x1xf32>
    %c0_1 = arith.constant 0 : index
    %c1 = arith.constant 1 : index
    %1 = vector.load %arg3[%c0_1, %c1] : memref<8x128xf32, #tpu.memory_space<vmem>>, vector<8x1xf32>
    %c0_2 = arith.constant 0 : index
    %c2 = arith.constant 2 : index
    %2 = vector.load %arg3[%c0_2, %c2] : memref<8x128xf32, #tpu.memory_space<vmem>>, vector<8x1xf32>
    %c0_3 = arith.constant 0 : index
    %c0_4 = arith.constant 0 : index
    %3 = vector.load %arg4[%c0_3, %c0_4] : memref<1x384xf32, #tpu.memory_space<vmem>>, vector<1x384xf32>
    %c0_5 = arith.constant 0 : index
    %c0_6 = arith.constant 0 : index
    %c0_7 = arith.constant 0 : index
    %4 = vector.load %arg1[%c0_5, %c0_6, %c0_7] : memref<1x4x512xbf16, #tpu.memory_space<vmem>>, vector<1x4x512xbf16>
    %5 = vector.shape_cast %4 : vector<1x4x512xbf16> to vector<4x512xbf16>
    %6 = vector.extract_strided_slice %5 {offsets = [0, 0], sizes = [4, 384], strides = [1, 1]} : vector<4x512xbf16> to vector<4x384xbf16>
    %c0_8 = arith.constant 0 : index
    %c0_9 = arith.constant 0 : index
    %7 = vector.load %arg6[%c0_8, %c0_9] : memref<36x384xbf16, #tpu.memory_space<vmem>>, vector<4x384xbf16>
    tpu.vector_store %arg6[%c0_8, %c0_9], %6 {strides = array<i32>} : memref<36x384xbf16, #tpu.memory_space<vmem>>, vector<4x384xbf16>,
    %8 = vector.extract_strided_slice %5 {offsets = [0, 1], sizes = [4, 384], strides = [1, 1]} : vector<4x512xbf16> to vector<4x384xbf16>
    %c4 = arith.constant 4 : index
    %c0_10 = arith.constant 0 : index
    %9 = vector.load %arg6[%c4, %c0_10] : memref<36x384xbf16, #tpu.memory_space<vmem>>, vector<4x384xbf16>
    tpu.vector_store %arg6[%c4, %c0_10], %8 {strides = array<i32>} : memref<36x384xbf16, #tpu.memory_space<vmem>>, vector<4x384xbf16>,
    %10 = vector.extract_strided_slice %5 {offsets = [0, 2], sizes = [4, 384], strides = [1, 1]} : vector<4x512xbf16> to vector<4x384xbf16>
    %c8 = arith.constant 8 : index
    %c0_11 = arith.constant 0 : index
    %11 = vector.load %arg6[%c8, %c0_11] : memref<36x384xbf16, #tpu.memory_space<vmem>>, vector<4x384xbf16>
    tpu.vector_store %arg6[%c8, %c0_11], %10 {strides = array<i32>} : memref<36x384xbf16, #tpu.memory_space<vmem>>, vector<4x384xbf16>,
    %12 = vector.extract_strided_slice %5 {offsets = [0, 18], sizes = [4, 384], strides = [1, 1]} : vector<4x512xbf16> to vector<4x384xbf16>
    %c12 = arith.constant 12 : index
    %c0_12 = arith.constant 0 : index
    %13 = vector.load %arg6[%c12, %c0_12] : memref<36x384xbf16, #tpu.memory_space<vmem>>, vector<4x384xbf16>
    tpu.vector_store %arg6[%c12, %c0_12], %12 {strides = array<i32>} : memref<36x384xbf16, #tpu.memory_space<vmem>>, vector<4x384xbf16>,
    %14 = vector.extract_strided_slice %5 {offsets = [0, 19], sizes = [4, 384], strides = [1, 1]} : vector<4x512xbf16> to vector<4x384xbf16>
    %c16 = arith.constant 16 : index
    %c0_13 = arith.constant 0 : index
    %15 = vector.load %arg6[%c16, %c0_13] : memref<36x384xbf16, #tpu.memory_space<vmem>>, vector<4x384xbf16>
    tpu.vector_store %arg6[%c16, %c0_13], %14 {strides = array<i32>} : memref<36x384xbf16, #tpu.memory_space<vmem>>, vector<4x384xbf16>,
    %16 = vector.extract_strided_slice %5 {offsets = [0, 20], sizes = [4, 384], strides = [1, 1]} : vector<4x512xbf16> to vector<4x384xbf16>
    %c20 = arith.constant 20 : index
    %c0_14 = arith.constant 0 : index
    %17 = vector.load %arg6[%c20, %c0_14] : memref<36x384xbf16, #tpu.memory_space<vmem>>, vector<4x384xbf16>
    tpu.vector_store %arg6[%c20, %c0_14], %16 {strides = array<i32>} : memref<36x384xbf16, #tpu.memory_space<vmem>>, vector<4x384xbf16>,
    %18 = vector.extract_strided_slice %5 {offsets = [0, 36], sizes = [4, 384], strides = [1, 1]} : vector<4x512xbf16> to vector<4x384xbf16>
    %c24 = arith.constant 24 : index
    %c0_15 = arith.constant 0 : index
    %19 = vector.load %arg6[%c24, %c0_15] : memref<36x384xbf16, #tpu.memory_space<vmem>>, vector<4x384xbf16>
    tpu.vector_store %arg6[%c24, %c0_15], %18 {strides = array<i32>} : memref<36x384xbf16, #tpu.memory_space<vmem>>, vector<4x384xbf16>,
    %20 = vector.extract_strided_slice %5 {offsets = [0, 37], sizes = [4, 384], strides = [1, 1]} : vector<4x512xbf16> to vector<4x384xbf16>
    %c28 = arith.constant 28 : index
    %c0_16 = arith.constant 0 : index
    %21 = vector.load %arg6[%c28, %c0_16] : memref<36x384xbf16, #tpu.memory_space<vmem>>, vector<4x384xbf16>
    tpu.vector_store %arg6[%c28, %c0_16], %20 {strides = array<i32>} : memref<36x384xbf16, #tpu.memory_space<vmem>>, vector<4x384xbf16>,
    %22 = vector.extract_strided_slice %5 {offsets = [0, 38], sizes = [4, 384], strides = [1, 1]} : vector<4x512xbf16> to vector<4x384xbf16>
    %c32 = arith.constant 32 : index
    %c0_17 = arith.constant 0 : index
    %23 = vector.load %arg6[%c32, %c0_17] : memref<36x384xbf16, #tpu.memory_space<vmem>>, vector<4x384xbf16>
    tpu.vector_store %arg6[%c32, %c0_17], %22 {strides = array<i32>} : memref<36x384xbf16, #tpu.memory_space<vmem>>, vector<4x384xbf16>,
    %c0_18 = arith.constant 0 : index
    %c0_19 = arith.constant 0 : index
    %24 = vector.load %arg2[%c0_18, %c0_19] : memref<8x36xbf16, #tpu.memory_space<vmem>>, vector<8x36xbf16>
    %c0_20 = arith.constant 0 : index
    %c0_21 = arith.constant 0 : index
    %25 = vector.load %arg6[%c0_20, %c0_21] : memref<36x384xbf16, #tpu.memory_space<vmem>>, vector<36x384xbf16>
    %cst = arith.constant dense<0.000000e+00> : vector<8x384xf32>
    %26 = tpu.matmul %24, %25, %cst {dimension_numbers = #tpu.dot_dimension_numbers<[1], [0], [0], [1], [0, 0, 1, 1], [], []>} : vector<8x36xbf16>, vector<36x384xbf16>, vector<8x384xf32> -> vector<8x384xf32>
    %27 = vector.broadcast %3 : vector<1x384xf32> to vector<8x384xf32>
    %28 = arith.mulf %26, %27 : vector<8x384xf32>
    %cst_22 = arith.constant dense<0.000000e+00> : vector<8xf32>
    %29 = vector.multi_reduction <add>, %28, %cst_22 [1] : vector<8x384xf32> to vector<8xf32>
    %30 = vector.shape_cast %29 : vector<8xf32> to vector<8x1xf32>
    %cst_23 = arith.constant 3.906250e-03 : f32
    %31 = vector.broadcast %cst_23 : f32 to vector<8x1xf32>
    %32 = arith.mulf %30, %31 : vector<8x1xf32>
    %33 = arith.subf %0, %32 : vector<8x1xf32>
    %34 = vector.broadcast %33 : vector<8x1xf32> to vector<8x384xf32>
    %35 = arith.addf %26, %34 : vector<8x384xf32>
    %36 = vector.broadcast %3 : vector<1x384xf32> to vector<8x384xf32>
    %37 = arith.mulf %35, %36 : vector<8x384xf32>
    %38 = arith.mulf %37, %37 : vector<8x384xf32>
    %cst_24 = arith.constant dense<0.000000e+00> : vector<8xf32>
    %39 = vector.multi_reduction <add>, %38, %cst_24 [1] : vector<8x384xf32> to vector<8xf32>
    %40 = vector.shape_cast %39 : vector<8xf32> to vector<8x1xf32>
    %cst_25 = arith.constant 3.906250e-03 : f32
    %41 = vector.broadcast %cst_25 : f32 to vector<8x1xf32>
    %42 = arith.mulf %40, %41 : vector<8x1xf32>
    %cst_26 = arith.constant 9.99999974E-6 : f32
    %43 = vector.broadcast %cst_26 : f32 to vector<8x1xf32>
    %44 = arith.addf %42, %43 : vector<8x1xf32>
    %45 = math.rsqrt %44 : vector<8x1xf32>
    %46 = arith.mulf %45, %1 : vector<8x1xf32>
    %47 = arith.mulf %33, %46 : vector<8x1xf32>
    %48 = arith.addf %47, %2 : vector<8x1xf32>
    %49 = vector.broadcast %46 : vector<8x1xf32> to vector<8x384xf32>
    %50 = arith.mulf %26, %49 : vector<8x384xf32>
    %51 = vector.broadcast %48 : vector<8x1xf32> to vector<8x384xf32>
    %52 = arith.addf %50, %51 : vector<8x384xf32>
    %cst_27 = arith.constant 0.000000e+00 : f32
    %53 = vector.broadcast %cst_27 : f32 to vector<8x384xf32>
    %54 = arith.maximumf %52, %53 : vector<8x384xf32>
    %c0_28 = arith.constant 0 : index
    %c0_29 = arith.constant 0 : index
    %c0_30 = arith.constant 0 : index
    %55 = vector.load %arg5[%c0_28, %c0_29, %c0_30] : memref<1x8x384xf32, #tpu.memory_space<vmem>>, vector<1x8x384xf32>
    %56 = vector.shape_cast %55 : vector<1x8x384xf32> to vector<8x384xf32>
    %57 = vector.shape_cast %54 : vector<8x384xf32> to vector<1x8x384xf32>
    tpu.vector_store %arg5[%c0_28, %c0_29, %c0_30], %57 {strides = array<i32>} : memref<1x8x384xf32, #tpu.memory_space<vmem>>, vector<1x8x384xf32>,
    return
  }
  func.func @transform_0(%arg0: i32) -> (i32, i32, i32) {
    %c0_i32 = arith.constant 0 : i32
    %c0_i32_0 = arith.constant 0 : i32
    %c0_i32_1 = arith.constant 0 : i32
    return %arg0, %c0_i32, %c0_i32_0 : i32, i32, i32
  }
  func.func @transform_1(%arg0: i32) -> (i32, i32) {
    %c0_i32 = arith.constant 0 : i32
    %c0_i32_0 = arith.constant 0 : i32
    %c0_i32_1 = arith.constant 0 : i32
    return %c0_i32, %c0_i32_0 : i32, i32
  }
  func.func @transform_2(%arg0: i32) -> (i32, i32) {
    %c0_i32 = arith.constant 0 : i32
    %c0_i32_0 = arith.constant 0 : i32
    %c0_i32_1 = arith.constant 0 : i32
    return %c0_i32, %c0_i32_0 : i32, i32
  }
  func.func @transform_3(%arg0: i32) -> (i32, i32) {
    %c0_i32 = arith.constant 0 : i32
    %c0_i32_0 = arith.constant 0 : i32
    %c0_i32_1 = arith.constant 0 : i32
    return %c0_i32, %c0_i32_0 : i32, i32
  }
  func.func @transform_4(%arg0: i32) -> (i32, i32, i32) {
    %c0_i32 = arith.constant 0 : i32
    %c0_i32_0 = arith.constant 0 : i32
    %c0_i32_1 = arith.constant 0 : i32
    return %arg0, %c0_i32, %c0_i32_0 : i32, i32, i32
  }
}

</mosaic_0001>

<llo_original>
// kernel: tpu_custom_call.1
$region0: #{tpu_custom_call.1}
  #allocation0 [shape = 'u32[]', space=smem, size = 0x4, offset = 0x4, fixed_abs, tag = 'smem constant byte address 0x4 - core index']
  #allocation1 [shape = 'u32[144,128]{1,0:T(1,128)}', space=vmem, size = 0x12000, scoped, tag = 'internal scratch']
  #allocation2 [shape = 'bf16[36,384]{1,0:T(8,128)(2,1)}', space=vmem, size = 0x7800, scoped, tag = 'scratch operand']
  %s0 = inlined_call_operand.hbm [shape: bf16[2,4,512], index: 0, kind: input, shape index: {}]
  %s1 = inlined_call_operand.hbm [shape: bf16[8,36], index: 1, kind: input, shape index: {}]
  %s2 = inlined_call_operand.hbm [shape: f32[8,128], index: 2, kind: input, shape index: {}]
  %s3 = inlined_call_operand.vmem [shape: f32[1,384], index: 3, kind: input, shape index: {}]
  %s4 = inlined_call_operand.hbm [shape: f32[2,8,384], index: 4, kind: output, shape index: {}]
  %s5 = sld [smem:[#allocation0]]
  $region61: #{tpu_custom_call.1} parent=0
    _
  %s7 = ssub.s32 1, %s5
  %s8 = scalar_select 0, %s7, %s5
  $region1: #{tpu_custom_call.1} parent=0
    #allocation3 [shape = 'u8[8192]{0}', space=vmem, size = 0x2000, scoped, tag = 'input window, operand 0']
    #allocation4 [shape = 's32[2]{0}', space=sflag, size = 0x8, scoped, tag = 'scoped memory for tpu_custom_call.1']
    #allocation5 [shape = 's32[2]{0}', space=sflag, size = 0x8, scoped, tag = 'scoped memory for tpu_custom_call.1']
    #allocation6 [shape = 'u8[2048]{0}', space=vmem, size = 0x800, scoped, tag = 'input window, operand 1, single buffered']
    #allocation7 [shape = 's32[1]{0}', space=sflag, size = 0x4, scoped, tag = 'scoped memory for tpu_custom_call.1']
    #allocation8 [shape = 'u8[4096]{0}', space=vmem, size = 0x1000, scoped, tag = 'input window, operand 2, single buffered']
    #allocation9 [shape = 'u8[24576]{0}', space=vmem, size = 0x6000, scoped, tag = 'output window, operand 0']
    %9 = vsyncpa [#allocation4], 0
    %s10 = scalar_lea.sflag [#allocation4], 1
    %11 = vsyncpa %s10, 0
    %12 = vsyncpa [#allocation7], 0
    %13 = vsyncpa [#allocation5], 0
    %s14 = scalar_lea.sflag [#allocation5], 1
    %15 = vsyncpa %s14, 0
    loop: start=0, step=1, limit=4
    $region2: #{tpu_custom_call.1} parent=1 // loop_pre_header
      _
    $region3: #{tpu_custom_call.1} parent=1 // loop_header
      %s17 = sphi 0, %s21
      %p18 = scmp.ge.s32.totalorder %s17, 4
      %s27 = sphi 0, %s29
      %s30 = sphi 0, %s27
      %s31 = sphi 0, %s30
      %s47 = sphi 0, %s31
      %s51 = sphi 0, %s51
      %s53 = sphi 0, %s51
      %s54 = sphi 0, %s53
      %s68 = sphi 0, %s54
      %s72 = sphi 0, %s72
      %s74 = sphi 0, %s72
      %s75 = sphi 0, %s74
      %s89 = sphi 0, %s75
      %s93 = sphi 0, %s93
      %s95 = sphi 0, %s93
      %s96 = sphi 0, %s95
      %s110 = sphi 0, %s96
      %s116 = sphi 0, %s118
      %s119 = sphi 0, %s116
      %s120 = sphi 0, %s119
      %s136 = sphi 0, %s120
    $region4: #{tpu_custom_call.1} parent=1 // loop_header_branch
      %20 = sbr.rel (%p18) target = $region8
    $region5: #{tpu_custom_call.1} parent=1 // loop_body
      %s22 = ssub.s32 %s17, 1
      %s23 = ssub.s32 %s17, 2
      %s24 = sadd.s32 %s17, 1
      %s25 = ssub.s32 %s17, %s24
      %p26 = scmp.eq.s32.totalorder %s25, 0
      %s28 = sadd.s32 %s27, 1
      %s29 = scalar_select %p26, %s27, %s28
      %p32 = pneg %p26
      %p33 = scmp.eq.s32.totalorder %s17, 1
      %p34 = por %p32, %p33
      %p35 = scmp.ne.s32.totalorder %s27, %s30
      %p36 = scmp.eq.s32.totalorder %s17, 0
      %p37 = por %p35, %p36
      %p38 = scmp.ne.s32.totalorder %s27, %s30
      %p39 = scmp.eq.s32.totalorder %s22, 1
      %p40 = por %p38, %p39
      %p41 = scmp.ne.s32.totalorder %s30, %s31
      %p42 = scmp.eq.s32.totalorder %s22, 0
      %p43 = por %p41, %p42
      %p44 = scmp.ne.s32.totalorder %s30, %s31
      %p45 = scmp.eq.s32.totalorder %s23, 1
      %p46 = por %p44, %p45
      %p48 = scmp.ne.s32.totalorder %s31, %s47
      %p49 = scmp.eq.s32.totalorder %s23, 0
      %p50 = por %p48, %p49
      %s52 = sadd.s32 %s51, 1
      %p55 = scmp.eq.s32.totalorder %s17, 1
      %p56 = scmp.ne.s32.totalorder %s51, %s53
      %p57 = scmp.eq.s32.totalorder %s17, 0
      %p58 = por %p56, %p57
      %p59 = scmp.ne.s32.totalorder %s51, %s53
      %p60 = scmp.eq.s32.totalorder %s22, 1
      %p61 = por %p59, %p60
      %p62 = scmp.ne.s32.totalorder %s53, %s54
      %p63 = scmp.eq.s32.totalorder %s22, 0
      %p64 = por %p62, %p63
      %p65 = scmp.ne.s32.totalorder %s53, %s54
      %p66 = scmp.eq.s32.totalorder %s23, 1
      %p67 = por %p65, %p66
      %p69 = scmp.ne.s32.totalorder %s54, %s68
      %p70 = scmp.eq.s32.totalorder %s23, 0
      %p71 = por %p69, %p70
      %s73 = sadd.s32 %s72, 1
      %p76 = scmp.eq.s32.totalorder %s17, 1
      %p77 = scmp.ne.s32.totalorder %s72, %s74
      %p78 = scmp.eq.s32.totalorder %s17, 0
      %p79 = por %p77, %p78
      %p80 = scmp.ne.s32.totalorder %s72, %s74
      %p81 = scmp.eq.s32.totalorder %s22, 1
      %p82 = por %p80, %p81
      %p83 = scmp.ne.s32.totalorder %s74, %s75
      %p84 = scmp.eq.s32.totalorder %s22, 0
      %p85 = por %p83, %p84
      %p86 = scmp.ne.s32.totalorder %s74, %s75
      %p87 = scmp.eq.s32.totalorder %s23, 1
      %p88 = por %p86, %p87
      %p90 = scmp.ne.s32.totalorder %s75, %s89
      %p91 = scmp.eq.s32.totalorder %s23, 0
      %p92 = por %p90, %p91
      %s94 = sadd.s32 %s93, 1
      %p97 = scmp.eq.s32.totalorder %s17, 1
      %p98 = scmp.ne.s32.totalorder %s93, %s95
      %p99 = scmp.eq.s32.totalorder %s17, 0
      %p100 = por %p98, %p99
      %p101 = scmp.ne.s32.totalorder %s93, %s95
      %p102 = scmp.eq.s32.totalorder %s22, 1
      %p103 = por %p101, %p102
      %p104 = scmp.ne.s32.totalorder %s95, %s96
      %p105 = scmp.eq.s32.totalorder %s22, 0
      %p106 = por %p104, %p105
      %p107 = scmp.ne.s32.totalorder %s95, %s96
      %p108 = scmp.eq.s32.totalorder %s23, 1
      %p109 = por %p107, %p108
      %p111 = scmp.ne.s32.totalorder %s96, %s110
      %p112 = scmp.eq.s32.totalorder %s23, 0
      %p113 = por %p111, %p112
      %s114 = ssub.s32 %s17, %s24
      %p115 = scmp.eq.s32.totalorder %s114, 0
      %s117 = sadd.s32 %s116, 1
      %s118 = scalar_select %p115, %s116, %s117
      %p121 = pneg %p115
      %p122 = scmp.eq.s32.totalorder %s17, 1
      %p123 = por %p121, %p122
      %p124 = scmp.ne.s32.totalorder %s116, %s119
      %p125 = scmp.eq.s32.totalorder %s17, 0
      %p126 = por %p124, %p125
      %p127 = scmp.ne.s32.totalorder %s116, %s119
      %p128 = scmp.eq.s32.totalorder %s22, 1
      %p129 = por %p127, %p128
      %p130 = scmp.ne.s32.totalorder %s119, %s120
      %p131 = scmp.eq.s32.totalorder %s22, 0
      %p132 = por %p130, %p131
      %p133 = scmp.ne.s32.totalorder %s119, %s120
      %p134 = scmp.eq.s32.totalorder %s23, 1
      %p135 = por %p133, %p134
      %p137 = scmp.ne.s32.totalorder %s120, %s136
      %p138 = scmp.eq.s32.totalorder %s23, 0
      %p139 = por %p137, %p138
      %p140 = scmp.le.s32.totalorder 1, %s17
      %p141 = scmp.lt.s32.totalorder %s17, 3
      %p142 = pnand %p140, %p141
      %p143 = pneg %p142
      // Predicated region
      $region9: #{tpu_custom_call.1} parent=5 // pred_check
        _
      $region10: #{tpu_custom_call.1} parent=5 // pred_check_branch
        %145 = sbr.rel (%p142) target = $region12
      $region11: #{tpu_custom_call.1} parent=5 // pred_region
        %s146 = ssub.s32 %s17, 1
        // Predicated region
        $region13: #{tpu_custom_call.1} parent=11 // pred_check
          %p147 = pneg %p64
        $region14: #{tpu_custom_call.1} parent=11 // pred_check_branch
          %149 = sbr.rel (%p147) target = $region16
        $region15: #{tpu_custom_call.1} parent=11 // pred_region
          %s151 = ssub.s32 64, 64
          %152 = vsyncadd [#allocation7], %s151
          %s154 = sshll.u32 [#allocation6], 4
          %s155 = int_to_ptr.vmem [resolvable:$true] %s154
          %157 = dma.hbm_to_vmem [thread:$0]  %s1, 64, %s155, [#allocation7]
        $region16: #{tpu_custom_call.1} parent=11 // pred_fallthru
          _
        // Predicated region
        $region17: #{tpu_custom_call.1} parent=11 // pred_check
          %p158 = pneg %p85
        $region18: #{tpu_custom_call.1} parent=11 // pred_check_branch
          %160 = sbr.rel (%p158) target = $region20
        $region19: #{tpu_custom_call.1} parent=11 // pred_region
          %s162 = ssub.s32 128, 128
          %163 = vsyncadd [#allocation7], %s162
          %s165 = sshll.u32 [#allocation8], 4
          %s166 = int_to_ptr.vmem [resolvable:$true] %s165
          %168 = dma.hbm_to_vmem [thread:$0]  %s2, 128, %s166, [#allocation7]
        $region20: #{tpu_custom_call.1} parent=11 // pred_fallthru
          _
        // Predicated region
        $region21: #{tpu_custom_call.1} parent=11 // pred_check
          %p169 = pneg %p106
        $region22: #{tpu_custom_call.1} parent=11 // pred_check_branch
          %171 = sbr.rel (%p169) target = $region24
        $region23: #{tpu_custom_call.1} parent=11 // pred_region
          _
        $region24: #{tpu_custom_call.1} parent=11 // pred_fallthru
          _
      $region12: #{tpu_custom_call.1} parent=5 // pred_fallthru
        _
      %p172 = scmp.lt.s32.totalorder %s17, 2
      // Predicated region
      $region25: #{tpu_custom_call.1} parent=5 // pred_check
        %p173 = pneg %p172
      $region26: #{tpu_custom_call.1} parent=5 // pred_check_branch
        %175 = sbr.rel (%p173) target = $region28
      $region27: #{tpu_custom_call.1} parent=5 // pred_region
        // Predicated region
        $region29: #{tpu_custom_call.1} parent=27 // pred_check
          %p176 = pneg %p37
        $region30: #{tpu_custom_call.1} parent=27 // pred_check_branch
          %178 = sbr.rel (%p176) target = $region32
        $region31: #{tpu_custom_call.1} parent=27 // pred_region
          %s179 = sand.u32 %s27, 1
          %s180 = scalar_lea.sflag [#allocation4], %s179
          %s181 = sand.u32 %s27, 1
          %s182 = smul.addr %s181, 8
          %s183 = scalar_lea.vmem [#allocation3], %s182
          %s185 = ssub.s32 128, 128
          %186 = vsyncadd %s180, %s185
          %s187 = smul.addr %s17, 4
          %s188 = smul.addr %s187, 32
          %s189 = scalar_lea.hbm %s0, %s188
          %s191 = sshll.u32 %s183, 4
          %s192 = int_to_ptr.vmem [resolvable:$true] %s191
          %194 = dma.hbm_to_vmem [thread:$0]  %s189, 128, %s192, %s180
        $region32: #{tpu_custom_call.1} parent=27 // pred_fallthru
          _
      $region28: #{tpu_custom_call.1} parent=5 // pred_fallthru
        _
      %p195 = scmp.le.s32.totalorder 1, %s17
      %p196 = scmp.lt.s32.totalorder %s17, 3
      %p197 = pnand %p195, %p196
      %p198 = pneg %p197
      // Predicated region
      $region33: #{tpu_custom_call.1} parent=5 // pred_check
        _
      $region34: #{tpu_custom_call.1} parent=5 // pred_check_branch
        %200 = sbr.rel (%p197) target = $region36
      $region35: #{tpu_custom_call.1} parent=5 // pred_region
        %s201 = ssub.s32 %s17, 1
        %s202 = sand.u32 %s30, 1
        %s203 = scalar_lea.sflag [#allocation4], %s202
        %s204 = sand.u32 %s30, 1
        %s205 = smul.addr %s204, 8
        %s206 = scalar_lea.vmem [#allocation3], %s205
        // Predicated region
        $region37: #{tpu_custom_call.1} parent=35 // pred_check
          %p207 = pneg %p43
        $region38: #{tpu_custom_call.1} parent=35 // pred_check_branch
          %209 = sbr.rel (%p207) target = $region40
        $region39: #{tpu_custom_call.1} parent=35 // pred_region
          %210 = dma.done %s203, 128
        $region40: #{tpu_custom_call.1} parent=35 // pred_fallthru
          _
        // Predicated region
        $region41: #{tpu_custom_call.1} parent=35 // pred_check
          %p211 = pneg %p64
        $region42: #{tpu_custom_call.1} parent=35 // pred_check_branch
          %213 = sbr.rel (%p211) target = $region44
        $region43: #{tpu_custom_call.1} parent=35 // pred_region
          %214 = dma.done [#allocation7], 64
        $region44: #{tpu_custom_call.1} parent=35 // pred_fallthru
          _
        // Predicated region
        $region45: #{tpu_custom_call.1} parent=35 // pred_check
          %p215 = pneg %p85
        $region46: #{tpu_custom_call.1} parent=35 // pred_check_branch
          %217 = sbr.rel (%p215) target = $region48
        $region47: #{tpu_custom_call.1} parent=35 // pred_region
          %218 = dma.done [#allocation7], 128
        $region48: #{tpu_custom_call.1} parent=35 // pred_fallthru
          _
        %s219 = sand.u32 %s30, 1
        %s220 = scalar_lea.sflag [#allocation4], %s219
        %s221 = sand.u32 %s30, 1
        %s222 = smul.addr %s221, 8
        %s223 = scalar_lea.vmem [#allocation3], %s222
        %p224 = pneg %p43
        %p225 = pneg %p40
        %p226 = pneg %p64
        %p227 = pneg %p61
        %p228 = pneg %p85
        %p229 = pneg %p82
        %p230 = pneg %p106
        %p231 = pneg %p103
        %p232 = pneg %p132
        %p233 = pneg %p129
        %s234 = sand.u32 %s119, 1
        %s235 = scalar_lea.sflag [#allocation5], %s234
        %s236 = sand.u32 %s119, 1
        %s237 = smul.addr %s236, 24
        %s238 = scalar_lea.vmem [#allocation9], %s237
        %v240 = vld [vmem:[#allocation8] sm:$0xff]
        %v241 = vld [vmem:[%s3] sm:$0x7]
        %v242 = vld [vmem:[%s206] sm:$0xff]
        %v244 = vcombine.high %v242, %v242
        %v246 = vunpack.c.l.s4 1983009808
        %v247 = vunpack.c.0.s8 %v246
        %v248 = vlaneseq
        %v249 = vshrl.u32 %v248, 7
        %v250 = vsub.s32 %v247, %v249
        %v251 = vrot.slane %v242, %v250
        %v253 = vunpack.c.l.s4 1983009808
        %v254 = vunpack.c.0.s8 %v253
        %v255 = vlaneseq
        %v256 = vshrl.u32 %v255, 7
        %v257 = vsub.s32 %v254, %v256
        %v258 = vrot.slane %v244, %v257
        %261 = vst [vmem:[#allocation2] sm:$0x33] %v251
        %262 = vst [vmem:[#allocation2 + $0x8] sm:$0x3] %v258
        %v263 = vcombine.low %v242, %v242
        %v265 = vunpack.c.l.s4 1983009808
        %v266 = vunpack.c.0.s8 %v265
        %v267 = vlaneseq
        %v268 = vshrl.u32 %v267, 7
        %v269 = vsub.s32 %v266, %v268
        %v270 = vrot.slane %v263, %v269
        %271 = vrot.lane.b32.xlu0 %v270, 127
        %v272 = vpop.permute.xlu0 %271
        %273 = vrot.lane.b32.xlu0 %v251, 127
        %v274 = vpop.permute.xlu0 %273
        %v275 = vrot.slane %v272, 4
        %v276 = vrot.slane %v274, 4
        %vm277 = vcmask 1043456
        %v278 = vsel %vm277, %v275, %v276
        %vm279 = vcmask 1039360
        %v280 = vsel %vm279, %v272, %v278
        %v281 = vsel %vm279, %v274, %v276
        %284 = vst [vmem:[#allocation2] sm:$0xcc] %v280
        %285 = vst [vmem:[#allocation2 + $0x8] sm:$0xc] %v281
        %286 = vrot.lane.b32.xlu0 %v251, 126
        %v287 = vpop.permute.xlu0 %286
        %288 = vrot.lane.b32.xlu0 %v258, 126
        %v289 = vpop.permute.xlu0 %288
        %v290 = vrot.slane %v287, 4
        %v291 = vrot.slane %v289, 4
        %v292 = vsel %vm277, %v290, %v291
        %vm293 = vcmask 1031168
        %v294 = vsel %vm293, %v287, %v292
        %v295 = vsel %vm293, %v289, %v291
        %298 = vst [vmem:[#allocation2 + $0xc] sm:$0x33] %v294
        %299 = vst [vmem:[#allocation2 + $0x14] sm:$0x3] %v295
        %300 = vrot.lane.b32.xlu0 %v270, 110
        %v301 = vpop.permute.xlu0 %300
        %302 = vrot.lane.b32.xlu0 %v251, 110
        %v303 = vpop.permute.xlu0 %302
        %v304 = vrot.slane %v301, 4
        %v305 = vrot.slane %v303, 4
        %v306 = vsel %vm277, %v304, %v305
        %vm307 = vcmask 900096
        %v308 = vsel %vm307, %v301, %v306
        %v309 = vsel %vm307, %v303, %v305
        %312 = vst [vmem:[#allocation2 + $0xc] sm:$0xcc] %v308
        %313 = vst [vmem:[#allocation2 + $0x14] sm:$0xc] %v309
        %314 = vrot.lane.b32.xlu0 %v251, 109
        %v315 = vpop.permute.xlu0 %314
        %316 = vrot.lane.b32.xlu0 %v258, 109
        %v317 = vpop.permute.xlu0 %316
        %v318 = vrot.slane %v315, 4
        %v319 = vrot.slane %v317, 4
        %v320 = vsel %vm277, %v318, %v319
        %vm321 = vcmask 891904
        %v322 = vsel %vm321, %v315, %v320
        %v323 = vsel %vm321, %v317, %v319
        %326 = vst [vmem:[#allocation2 + $0x18] sm:$0x33] %v322
        %327 = vst [vmem:[#allocation2 + $0x20] sm:$0x3] %v323
        %328 = vrot.lane.b32.xlu0 %v270, 108
        %v329 = vpop.permute.xlu0 %328
        %330 = vrot.lane.b32.xlu0 %v251, 108
        %v331 = vpop.permute.xlu0 %330
        %v332 = vrot.slane %v329, 4
        %v333 = vrot.slane %v331, 4
        %v334 = vsel %vm277, %v332, %v333
        %vm335 = vcmask 883712
        %v336 = vsel %vm335, %v329, %v334
        %v337 = vsel %vm335, %v331, %v333
        %340 = vst [vmem:[#allocation2 + $0x18] sm:$0xcc] %v336
        %341 = vst [vmem:[#allocation2 + $0x20] sm:$0xc] %v337
        %342 = vrot.lane.b32.xlu0 %v251, 92
        %v343 = vpop.permute.xlu0 %342
        %344 = vrot.lane.b32.xlu0 %v258, 92
        %v345 = vpop.permute.xlu0 %344
        %v346 = vrot.slane %v343, 4
        %v347 = vrot.slane %v345, 4
        %v348 = vsel %vm277, %v346, %v347
        %vm349 = vcmask 752640
        %v350 = vsel %vm349, %v343, %v348
        %v351 = vsel %vm349, %v345, %v347
        %354 = vst [vmem:[#allocation2 + $0x24] sm:$0x33] %v350
        %355 = vst [vmem:[#allocation2 + $0x2c] sm:$0x3] %v351
        %356 = vrot.lane.b32.xlu0 %v270, 91
        %v357 = vpop.permute.xlu0 %356
        %358 = vrot.lane.b32.xlu0 %v251, 91
        %v359 = vpop.permute.xlu0 %358
        %v360 = vrot.slane %v357, 4
        %v361 = vrot.slane %v359, 4
        %v362 = vsel %vm277, %v360, %v361
        %vm363 = vcmask 744448
        %v364 = vsel %vm363, %v357, %v362
        %v365 = vsel %vm363, %v359, %v361
        %368 = vst [vmem:[#allocation2 + $0x24] sm:$0xcc] %v364
        %369 = vst [vmem:[#allocation2 + $0x2c] sm:$0xc] %v365
        %370 = vrot.lane.b32.xlu0 %v251, 90
        %v371 = vpop.permute.xlu0 %370
        %372 = vrot.lane.b32.xlu0 %v258, 90
        %v373 = vpop.permute.xlu0 %372
        %v374 = vrot.slane %v371, 4
        %v375 = vrot.slane %v373, 4
        %v376 = vsel %vm277, %v374, %v375
        %vm377 = vcmask 736256
        %v378 = vsel %vm377, %v371, %v376
        %v379 = vsel %vm377, %v373, %v375
        %382 = vst [vmem:[#allocation2 + $0x30] sm:$0x33] %v378
        %383 = vst [vmem:[#allocation2 + $0x38] sm:$0x3] %v379
        %v384 = vld [vmem:[#allocation6] sm:$0xf]
        %v385 = vld [vmem:[#allocation2] sm:$0xff]
        %v386 = vld [vmem:[#allocation2 + $0x8] sm:$0xf]
        %v387 = vld [vmem:[#allocation2 + $0xc] sm:$0xff]
        %v388 = vld [vmem:[#allocation2 + $0x14] sm:$0xf]
        %v389 = vld [vmem:[#allocation2 + $0x18] sm:$0xff]
        %v390 = vld [vmem:[#allocation2 + $0x20] sm:$0xf]
        %v391 = vld [vmem:[#allocation2 + $0x24] sm:$0xff]
        %v392 = vld [vmem:[#allocation2 + $0x2c] sm:$0xf]
        %v393 = vld [vmem:[#allocation2 + $0x30] sm:$0x33]
        %v394 = vld [vmem:[#allocation2 + $0x38] sm:$0x3]
        %v405 = vunpack.c.l.b16 %v385
        %v406 = vunpack.c.h.b16 %v385
        %v407 = vunpack.c.l.b16 %v386
        %v408 = vunpack.c.l.b16 %v387
        %v409 = vunpack.c.h.b16 %v387
        %v410 = vunpack.c.l.b16 %v388
        %v411 = vunpack.c.l.b16 %v389
        %v412 = vunpack.c.h.b16 %v389
        %v413 = vunpack.c.l.b16 %v390
        %v414 = vunpack.c.l.b16 %v391
        %v415 = vunpack.c.h.b16 %v391
        %v416 = vunpack.c.l.b16 %v392
        %v417 = vunpack.c.l.b16 %v393
        %v418 = vunpack.c.h.b16 %v393
        %v419 = vunpack.c.l.b16 %v394
        %v420 = vpack.c.b16 %v408, %v405
        %v421 = vpack.c.b16 %v409, %v406
        %v422 = vpack.c.b16 %v410, %v407
        %v423 = vpack.c.b16 %v414, %v411
        %v424 = vpack.c.b16 %v415, %v412
        %v425 = vpack.c.b16 %v416, %v413
        %v426 = vpack.c.b16 %v417, %v417
        %v427 = vpack.c.b16 %v418, %v418
        %v428 = vpack.c.b16 %v419, %v419
        %vm435 = vcmask 293888
        %v437 = vsel %vm435, %v384, 0
        %vm439 = vcmask 1041408
        %v441 = vsel %vm439, %v426, 0
        %v444 = vsel %vm439, %v427, 0
        %v447 = vsel %vm439, %v428, 0
        %449 = vmatprep.subr.bf16.mxu0 %v421
        %450 = vmatpush1.bf16.msra.mxu0 %v420
        %451 = vmatprep.subr.bf16.mxu0 %v424
        %452 = vmatpush1.bf16.msra.mxu0 %v423
        %453 = vmatprep.subr.bf16.mxu0 %v444
        %454 = vmatpush1.bf16.msra.mxu0 %v441
        %455 = vmatprep.subr.bf16.mxu0 0
        %456 = vmatpush1.bf16.msra.mxu0 0
        %457 = vmatprep.subr.bf16.mxu0 0
        %458 = vmatpush1.bf16.msra.mxu0 0
        %459 = vmatprep.subr.bf16.mxu0 0
        %460 = vmatpush1.bf16.msra.mxu0 0
        %461 = vmatprep.subr.bf16.mxu0 0
        %462 = vmatpush1.bf16.msra.mxu0 0
        %463 = vmatprep.subr.bf16.mxu0 0
        %464 = vmatpush1.bf16.msra.mxu0 0
        %465 = vmatprep.subr.bf16.mxu0 0
        %466 = vmatpush1.bf16.msra.mxu0 0
        %467 = vmatprep.subr.bf16.mxu0 0
        %468 = vmatpush1.bf16.msra.mxu0 0
        %469 = vmatprep.subr.bf16.mxu0 0
        %470 = vmatpush1.bf16.msra.mxu0 0
        %471 = vmatprep.subr.bf16.mxu0 0
        %472 = vmatpush1.bf16.msra.mxu0 0
        %473 = vmatprep.subr.bf16.mxu0 0
        %474 = vmatpush1.bf16.msra.mxu0 0
        %475 = vmatprep.subr.bf16.mxu0 0
        %476 = vmatpush1.bf16.msra.mxu0 0
        %477 = vmatprep.subr.bf16.mxu0 0
        %478 = vmatpush1.bf16.msra.mxu0 0
        %479 = vmatprep.subr.bf16.mxu0 0
        %480 = vmatpush1.bf16.msra.mxu0 0
        %481 = vmatprep.mubr.bf16.mxu0 0
        %482 = vmatmul.mubr.bf16.gmra.mrb[0].mxu0 %v437
        %v483 = vpop.f32.mrb[0].mxu0
        %v484 = vadd.f32 0.0, %v483
        %v485 = vpop.f32.mrb[0].mxu0
        %v486 = vadd.f32 0.0, %v485
        %v487 = vpop.f32.mrb[0].mxu0
        %v488 = vpop.f32.mrb[0].mxu0
        %489 = vdwg.mxu0
        %490 = vmatprep.subr.bf16.mxu0 0
        %491 = vmatpush1.bf16.msra.mxu0 %v422
        %492 = vmatprep.subr.bf16.mxu0 0
        %493 = vmatpush1.bf16.msra.mxu0 %v425
        %494 = vmatprep.subr.bf16.mxu0 0
        %495 = vmatpush1.bf16.msra.mxu0 %v447
        %496 = vmatprep.subr.bf16.mxu0 0
        %497 = vmatpush1.bf16.msra.mxu0 0
        %498 = vmatprep.subr.bf16.mxu0 0
        %499 = vmatpush1.bf16.msra.mxu0 0
        %500 = vmatprep.subr.bf16.mxu0 0
        %501 = vmatpush1.bf16.msra.mxu0 0
        %502 = vmatprep.subr.bf16.mxu0 0
        %503 = vmatpush1.bf16.msra.mxu0 0
        %504 = vmatprep.subr.bf16.mxu0 0
        %505 = vmatpush1.bf16.msra.mxu0 0
        %506 = vmatprep.subr.bf16.mxu0 0
        %507 = vmatpush1.bf16.msra.mxu0 0
        %508 = vmatprep.subr.bf16.mxu0 0
        %509 = vmatpush1.bf16.msra.mxu0 0
        %510 = vmatprep.subr.bf16.mxu0 0
        %511 = vmatpush1.bf16.msra.mxu0 0
        %512 = vmatprep.subr.bf16.mxu0 0
        %513 = vmatpush1.bf16.msra.mxu0 0
        %514 = vmatprep.subr.bf16.mxu0 0
        %515 = vmatpush1.bf16.msra.mxu0 0
        %516 = vmatprep.subr.bf16.mxu0 0
        %517 = vmatpush1.bf16.msra.mxu0 0
        %518 = vmatprep.subr.bf16.mxu0 0
        %519 = vmatpush1.bf16.msra.mxu0 0
        %520 = vmatprep.subr.bf16.mxu0 0
        %521 = vmatpush1.bf16.msra.mxu0 0
        %522 = vmatprep.mubr.bf16.mxu0 0
        %523 = vmatmul.mubr.bf16.gmra.mrb[0].mxu0 %v437
        %v524 = vpop.f32.mrb[0].mxu0
        %v525 = vadd.f32 0.0, %v524
        %v526 = vpop.f32.mrb[0].mxu0
        %v527 = vpop.f32.mrb[0].mxu0
        %v528 = vpop.f32.mrb[0].mxu0
        %529 = vdwg.mxu0
        %v531 = vlaneseq
        %v532 = vshrl.u32 %v531, 7
        %v533 = vsub.s32 0, %v532
        %v534 = vrot.slane %v241, %v533
        %v535 = vlaneseq
        %v536 = vshrl.u32 %v535, 7
        %v537 = vsub.s32 1, %v536
        %v538 = vrot.slane %v241, %v537
        %v539 = vlaneseq
        %v540 = vshrl.u32 %v539, 7
        %v541 = vsub.s32 2, %v540
        %v542 = vrot.slane %v241, %v541
        %v546 = vmul.f32 %v484, %v534
        %v547 = vmul.f32 %v486, %v538
        %v548 = vmul.f32 %v525, %v542
        %v549 = vadd.f32 %v546, %v547
        %v550 = vadd.f32 %v549, %v548
        %551 = vadd.xlane.f32.xlu0 %v550
        %v552 = vpop.xlane.xlu0 %551
        %v553 = vmul.f32 %v552, 0.00390625
        %v554 = vsub.f32 %v240, %v553
        %556 = vset.pattern.permute.xlu0 0
        %557 = vperm.xlu0 %556, %v554
        %v558 = vpop.permute.xlu0 %557
        %v560 = vadd.f32 %v484, %v558
        %v561 = vadd.f32 %v486, %v558
        %v562 = vadd.f32 %v525, %v558
        %v563 = vmul.f32 %v560, %v534
        %v564 = vmul.f32 %v561, %v538
        %v565 = vmul.f32 %v562, %v542
        %v566 = vmul.f32 %v563, %v563
        %v567 = vmul.f32 %v564, %v564
        %v568 = vmul.f32 %v565, %v565
        %v569 = vadd.f32 %v566, %v567
        %v570 = vadd.f32 %v569, %v568
        %571 = vadd.xlane.f32.xlu0 %v570
        %v572 = vpop.xlane.xlu0 %571
        %v573 = vmul.f32 %v572, 0.00390625
        %v574 = vadd.f32 %v573, 1e-05
        %v575 = vrsqrt.pop %v574
        %v576 = vmul.f32 %v575, %v240
        %578 = vrot.lane.b32.xlu0 %v576, 127
        %v579 = vpop.permute.xlu0 %578
        %v581 = vmul.f32 %v554, %v579
        %583 = vrot.lane.b32.xlu0 %v240, 126
        %v584 = vpop.permute.xlu0 %583
        %v586 = vadd.f32 %v581, %v584
        %587 = vset.pattern.permute.xlu0 1
        %588 = vperm.xlu0 %587, %v576
        %v589 = vpop.permute.xlu0 %588
        %v591 = vmul.f32 %v484, %v589
        %v592 = vmul.f32 %v486, %v589
        %v593 = vmul.f32 %v525, %v589
        %595 = vset.pattern.permute.xlu0 0
        %596 = vperm.xlu0 %595, %v586
        %v597 = vpop.permute.xlu0 %596
        %v599 = vadd.f32 %v591, %v597
        %v600 = vadd.f32 %v592, %v597
        %v601 = vadd.f32 %v593, %v597
        %v602 = vmax.f32 %v599, 0.0
        %v603 = vmax.f32 %v600, 0.0
        %v604 = vmax.f32 %v601, 0.0
        %605 = vst [vmem:[%s238] sm:$0xff] %v602
        %606 = vst [vmem:[%s238 + $0x8] sm:$0xff] %v603
        %607 = vst [vmem:[%s238 + $0x10] sm:$0xff] %v604
        %s608 = sand.u32 %s119, 1
        %s609 = scalar_lea.sflag [#allocation5], %s608
        %s610 = sand.u32 %s119, 1
        %s611 = smul.addr %s610, 24
        %s612 = scalar_lea.vmem [#allocation9], %s611
        // Predicated region
        $region49: #{tpu_custom_call.1} parent=35 // pred_check
          %p613 = pneg %p129
        $region50: #{tpu_custom_call.1} parent=35 // pred_check_branch
          %615 = sbr.rel (%p613) target = $region52
        $region51: #{tpu_custom_call.1} parent=35 // pred_region
          %s617 = ssub.s32 384, 384
          %618 = vsyncadd %s609, %s617
          %s619 = smul.addr %s22, 3
          %s620 = smul.addr %s619, 128
          %s621 = scalar_lea.hbm %s4, %s620
          %s623 = sshll.u32 %s612, 4
          %s624 = int_to_ptr.vmem [resolvable:$true] %s623
          %626 = dma.vmem_to_hbm [thread:$0]  %s624, 384, %s621, %s609
        $region52: #{tpu_custom_call.1} parent=35 // pred_fallthru
          _
      $region36: #{tpu_custom_call.1} parent=5 // pred_fallthru
        _
      %p627 = scmp.le.s32.totalorder 2, %s17
      // Predicated region
      $region53: #{tpu_custom_call.1} parent=5 // pred_check
        %p628 = pneg %p627
      $region54: #{tpu_custom_call.1} parent=5 // pred_check_branch
        %630 = sbr.rel (%p628) target = $region56
      $region55: #{tpu_custom_call.1} parent=5 // pred_region
        %s631 = ssub.s32 %s17, 2
        // Predicated region
        $region57: #{tpu_custom_call.1} parent=55 // pred_check
          %p632 = pneg %p135
        $region58: #{tpu_custom_call.1} parent=55 // pred_check_branch
          %634 = sbr.rel (%p632) target = $region60
        $region59: #{tpu_custom_call.1} parent=55 // pred_region
          %s635 = sand.u32 %s120, 1
          %s636 = scalar_lea.sflag [#allocation5], %s635
          %s637 = sand.u32 %s120, 1
          %s638 = smul.addr %s637, 24
          %s639 = scalar_lea.vmem [#allocation9], %s638
          %640 = dma.done %s636, 384
        $region60: #{tpu_custom_call.1} parent=55 // pred_fallthru
          _
      $region56: #{tpu_custom_call.1} parent=5 // pred_fallthru
        _
    $region6: #{tpu_custom_call.1} parent=1 // loop_footer
      %s21 = sadd.s32 1, %s17
    $region7: #{tpu_custom_call.1} parent=1 // loop_footer_branch
      %16 = sbr.rel target = $region3
    $region8: #{tpu_custom_call.1} parent=1 // loop_exit
      _
    %641 = vsyncpa [#allocation4], 1
    %s642 = scalar_lea.sflag [#allocation4], 1
    %643 = vsyncpa %s642, 1
    %644 = vsyncpa [#allocation7], 1
    %645 = vsyncpa [#allocation5], 1
    %s646 = scalar_lea.sflag [#allocation5], 1
    %647 = vsyncpa %s646, 1

</llo_original>
